<compile_context>
chip_gen: v6e
topology: v6e:2x2x1
jax: 0.10.0
libtpu: 0.0.40
codegen_flags: <defaults>
</compile_context>

<pallas_src>
import jax
import jax.numpy as jnp
from jax import lax
from jax.experimental import pallas as pl
from jax.experimental.pallas import tpu as pltpu

CONTEXT_SIZE = 2
EMBEDDING_DIM = 5
HIDDEN = 128
VOCAB_SIZE = 64

_NEG_INF = -1e30  # finite mask for padded vocab lanes (exp underflows to 0, no NaNs)


def ngram_kernel(ids_ref, emb_ref, w1_ref, b1_ref, w2_ref, b2_ref, out_ref):
    tm = out_ref.shape[0]            # batch tile (rows per grid step)
    vocab = emb_ref.shape[0]         # true vocab (un-padded embedding table)

    ids = ids_ref[...]               # (tm, CONTEXT_SIZE) int32
    emb = emb_ref[...]               # (vocab, EMBEDDING_DIM) f32
    lane_iota = lax.broadcasted_iota(jnp.int32, (tm, vocab), 1)

    # Embedding gather folded into per-context partial matmuls (exact: onehot
    # selects one row of E @ W1_i):
    #   h = b1 + sum_i E[ids[:, i]] @ W1_i  =  b1 + sum_i onehot_i @ (E @ W1_i)
    acc = jnp.zeros((tm, HIDDEN), jnp.float32)
    for i in range(CONTEXT_SIZE):
        ew = jnp.dot(emb, w1_ref[i], preferred_element_type=jnp.float32)   # (vocab, 128)
        onehot = (ids[:, i:i + 1] == lane_iota).astype(jnp.float32)        # (tm, vocab)
        acc = acc + jnp.dot(onehot, ew, preferred_element_type=jnp.float32)

    h = jnp.maximum(acc + b1_ref[...], 0.0)                                # (tm, 128)

    # linear2; padded vocab lanes get bias = -1e30 -> zero softmax mass
    z = jnp.dot(h, w2_ref[...], preferred_element_type=jnp.float32) + b2_ref[...]

    # numerically-stable log_softmax over the (padded) vocab lanes
    m = jnp.max(z, axis=1, keepdims=True)
    lse = m + jnp.log(jnp.sum(jnp.exp(z - m), axis=1, keepdims=True))
    out_ref[...] = z - lse                                                 # (tm, vocab_pad)


def ngram_forward(inputs, emb_table, w1, b1, w2, b2, *, m_tile=128):
    """inputs: (context_size,) or (B, context_size) int32 token ids.
    Returns (1, vocab) or (B, vocab) f32 log-probs (one row per context)."""
    inputs = jnp.asarray(inputs, jnp.int32)
    if inputs.ndim == 1:
        inputs = inputs[None, :]
    batch = inputs.shape[0]
    vocab, emb_dim = emb_table.shape

    # Adaptive tile: keep (8,128)-aligned, but don't pad tiny batches to 128 rows.
    m_tile = min(m_tile, max(8, pl.cdiv(batch, 8) * 8))
    b_pad = pl.cdiv(batch, m_tile) * m_tile      # full M tiles
    vocab_pad = pl.cdiv(vocab, 128) * 128        # lane-dense output slab

    ids = jnp.zeros((b_pad, CONTEXT_SIZE), jnp.int32).at[:batch, :].set(inputs)
    w1_3d = jnp.asarray(w1, jnp.float32).reshape(CONTEXT_SIZE, emb_dim, HIDDEN)
    b1_2d = jnp.asarray(b1, jnp.float32).reshape(1, HIDDEN)
    w2_p = jnp.zeros((HIDDEN, vocab_pad), jnp.float32).at[:, :vocab].set(w2)
    b2_p = (jnp.full((1, vocab_pad), _NEG_INF, jnp.float32)
            .at[:, :vocab].set(jnp.asarray(b2, jnp.float32).reshape(1, vocab)))

    grid_spec = pltpu.PrefetchScalarGridSpec(
        num_scalar_prefetch=0,
        grid=(b_pad // m_tile,),
        in_specs=[
            pl.BlockSpec((m_tile, CONTEXT_SIZE), lambda i: (i, 0)),            # ids stream
            pl.BlockSpec((vocab, emb_dim), lambda i: (0, 0)),                  # resident
            pl.BlockSpec((CONTEXT_SIZE, emb_dim, HIDDEN), lambda i: (0, 0, 0)),
            pl.BlockSpec((1, HIDDEN), lambda i: (0, 0)),
            pl.BlockSpec((HIDDEN, vocab_pad), lambda i: (0, 0)),
            pl.BlockSpec((1, vocab_pad), lambda i: (0, 0)),
        ],
        out_specs=pl.BlockSpec((m_tile, vocab_pad), lambda i: (i, 0)),         # out stream
    )

    out = pl.pallas_call(
        ngram_kernel,
        out_shape=jax.ShapeDtypeStruct((b_pad, vocab_pad), jnp.float32),
        grid_spec=grid_spec,
        compiler_params=pltpu.CompilerParams(
            dimension_semantics=("parallel",)),   # shard batch tiles across TCs
    )(ids, jnp.asarray(emb_table, jnp.float32), w1_3d, b1_2d, w2_p, b2_p)

    return out[:batch, :vocab]


def ngram_reference(contexts, emb_table, w1, b1, w2, b2):
    x = emb_table[contexts].reshape(contexts.shape[0], -1)
    h = jax.nn.relu(jnp.dot(x, w1, precision=lax.Precision.HIGHEST) + b1)
    z = jnp.dot(h, w2, precision=lax.Precision.HIGHEST) + b2
    return jax.nn.log_softmax(z, axis=-1)


if __name__ == "__main__":
    key = jax.random.PRNGKey(0)
    k_emb, k_w1, k_b1, k_w2, k_b2, k_in = jax.random.split(key, 6)
    in_feat = CONTEXT_SIZE * EMBEDDING_DIM

    # Deterministic, PyTorch-shaped parameters (Linear weights stored transposed:
    # (in_features, out_features); biases 1-D).
    emb_table = jax.random.normal(k_emb, (VOCAB_SIZE, EMBEDDING_DIM), jnp.float32)
    w1 = jax.random.uniform(k_w1, (in_feat, HIDDEN), jnp.float32, -0.3, 0.3)
    b1 = jax.random.uniform(k_b1, (HIDDEN,), jnp.float32, -0.3, 0.3)
    w2 = jax.random.uniform(k_w2, (HIDDEN, VOCAB_SIZE), jnp.float32, -0.1, 0.1)
    b2 = jax.random.uniform(k_b2, (VOCAB_SIZE,), jnp.float32, -0.1, 0.1)

    # Small batch of context windows (each row = one (context_size,) id window).
    batch = 20
    contexts = jax.random.randint(k_in, (batch, CONTEXT_SIZE), 0, VOCAB_SIZE, jnp.int32)

    log_probs = ngram_forward(contexts, emb_table, w1, b1, w2, b2)
    jax.block_until_ready(log_probs)

    ref = ngram_reference(contexts, emb_table, w1, b1, w2, b2)
    assert log_probs.shape == (batch, VOCAB_SIZE)
    assert jnp.allclose(log_probs, ref, atol=2e-4, rtol=2e-4)

    # Original-module path: single (context_size,) input -> (1, vocab) log-probs.
    single = ngram_forward(contexts[0], emb_table, w1, b1, w2, b2)
    jax.block_until_ready(single)
    assert single.shape == (1, VOCAB_SIZE)
    assert jnp.allclose(single, ref[0:1], atol=2e-4, rtol=2e-4)

    print("KERNEL_OK")
</pallas_src>

<mosaic_0001>
module attributes {stable_mosaic.version = 11 : i64} {
  func.func @ngram_kernel(%arg0: i32, %arg1: memref<24x2xi32, #tpu.memory_space<vmem>>, %arg2: memref<64x5xf32, #tpu.memory_space<vmem>>, %arg3: memref<2x5x128xf32, #tpu.memory_space<vmem>>, %arg4: memref<1x128xf32, #tpu.memory_space<vmem>>, %arg5: memref<128x128xf32, #tpu.memory_space<vmem>>, %arg6: memref<1x128xf32, #tpu.memory_space<vmem>>, %arg7: memref<24x128xf32, #tpu.memory_space<vmem>>) attributes {dimension_semantics = [#tpu.dimension_semantics<parallel>], iteration_bounds = array<i64: 1>, scalar_prefetch = 0 : i64, scratch_operands = 0 : i64, tpu.core_type = #tpu.core_type<tc>, window_params = [{transform_indices = @transform_0, window_bounds = array<i64: 24, 2>}, {pipeline_mode = #tpu.pipeline_mode<synchronous>, transform_indices = @transform_1, window_bounds = array<i64: 64, 5>}, {pipeline_mode = #tpu.pipeline_mode<synchronous>, transform_indices = @transform_2, window_bounds = array<i64: 2, 5, 128>}, {pipeline_mode = #tpu.pipeline_mode<synchronous>, transform_indices = @transform_3, window_bounds = array<i64: 1, 128>}, {pipeline_mode = #tpu.pipeline_mode<synchronous>, transform_indices = @transform_4, window_bounds = array<i64: 128, 128>}, {pipeline_mode = #tpu.pipeline_mode<synchronous>, transform_indices = @transform_5, window_bounds = array<i64: 1, 128>}, {transform_indices = @transform_6, window_bounds = array<i64: 24, 128>}]} {
    %c0 = arith.constant 0 : index
    %c0_0 = arith.constant 0 : index
    %0 = vector.load %arg1[%c0, %c0_0] : memref<24x2xi32, #tpu.memory_space<vmem>>, vector<24x2xi32>
    %c0_1 = arith.constant 0 : index
    %c0_2 = arith.constant 0 : index
    %1 = vector.load %arg2[%c0_1, %c0_2] : memref<64x5xf32, #tpu.memory_space<vmem>>, vector<64x5xf32>
    %2 = tpu.iota {dimensions = array<i32: 1>} : vector<24x64xi32>
    %cst = arith.constant 0.000000e+00 : f32
    %3 = vector.broadcast %cst : f32 to vector<24x128xf32>
    %c0_3 = arith.constant 0 : index
    %c0_4 = arith.constant 0 : index
    %c0_5 = arith.constant 0 : index
    %4 = vector.load %arg3[%c0_3, %c0_4, %c0_5] : memref<2x5x128xf32, #tpu.memory_space<vmem>>, vector<1x5x128xf32>
    %5 = vector.shape_cast %4 : vector<1x5x128xf32> to vector<5x128xf32>
    %cst_6 = arith.constant dense<0.000000e+00> : vector<64x128xf32>
    %6 = tpu.matmul %1, %5, %cst_6 {dimension_numbers = #tpu.dot_dimension_numbers<[1], [0], [0], [1], [0, 0, 1, 1], [], []>} : vector<64x5xf32>, vector<5x128xf32>, vector<64x128xf32> -> vector<64x128xf32>
    %7 = vector.extract_strided_slice %0 {offsets = [0, 0], sizes = [24, 1], strides = [1, 1]} : vector<24x2xi32> to vector<24x1xi32>
    %8 = vector.broadcast %7 : vector<24x1xi32> to vector<24x64xi32>
    %9 = arith.cmpi eq, %8, %2 : vector<24x64xi32>
    %10 = arith.extui %9 : vector<24x64xi1> to vector<24x64xi32>
    %11 = arith.sitofp %10 : vector<24x64xi32> to vector<24x64xf32>
    %cst_7 = arith.constant dense<0.000000e+00> : vector<24x128xf32>
    %12 = tpu.matmul %11, %6, %cst_7 {dimension_numbers = #tpu.dot_dimension_numbers<[1], [0], [0], [1], [0, 0, 1, 1], [], []>} : vector<24x64xf32>, vector<64x128xf32>, vector<24x128xf32> -> vector<24x128xf32>
    %13 = arith.addf %3, %12 : vector<24x128xf32>
    %c1 = arith.constant 1 : index
    %c0_8 = arith.constant 0 : index
    %c0_9 = arith.constant 0 : index
    %14 = vector.load %arg3[%c1, %c0_8, %c0_9] : memref<2x5x128xf32, #tpu.memory_space<vmem>>, vector<1x5x128xf32>
    %15 = vector.shape_cast %14 : vector<1x5x128xf32> to vector<5x128xf32>
    %cst_10 = arith.constant dense<0.000000e+00> : vector<64x128xf32>
    %16 = tpu.matmul %1, %15, %cst_10 {dimension_numbers = #tpu.dot_dimension_numbers<[1], [0], [0], [1], [0, 0, 1, 1], [], []>} : vector<64x5xf32>, vector<5x128xf32>, vector<64x128xf32> -> vector<64x128xf32>
    %17 = vector.extract_strided_slice %0 {offsets = [0, 1], sizes = [24, 1], strides = [1, 1]} : vector<24x2xi32> to vector<24x1xi32>
    %18 = vector.broadcast %17 : vector<24x1xi32> to vector<24x64xi32>
    %19 = arith.cmpi eq, %18, %2 : vector<24x64xi32>
    %20 = arith.extui %19 : vector<24x64xi1> to vector<24x64xi32>
    %21 = arith.sitofp %20 : vector<24x64xi32> to vector<24x64xf32>
    %cst_11 = arith.constant dense<0.000000e+00> : vector<24x128xf32>
    %22 = tpu.matmul %21, %16, %cst_11 {dimension_numbers = #tpu.dot_dimension_numbers<[1], [0], [0], [1], [0, 0, 1, 1], [], []>} : vector<24x64xf32>, vector<64x128xf32>, vector<24x128xf32> -> vector<24x128xf32>
    %23 = arith.addf %13, %22 : vector<24x128xf32>
    %c0_12 = arith.constant 0 : index
    %c0_13 = arith.constant 0 : index
    %24 = vector.load %arg4[%c0_12, %c0_13] : memref<1x128xf32, #tpu.memory_space<vmem>>, vector<1x128xf32>
    %25 = vector.broadcast %24 : vector<1x128xf32> to vector<24x128xf32>
    %26 = arith.addf %23, %25 : vector<24x128xf32>
    %cst_14 = arith.constant 0.000000e+00 : f32
    %27 = vector.broadcast %cst_14 : f32 to vector<24x128xf32>
    %28 = arith.maximumf %26, %27 : vector<24x128xf32>
    %c0_15 = arith.constant 0 : index
    %c0_16 = arith.constant 0 : index
    %29 = vector.load %arg5[%c0_15, %c0_16] : memref<128x128xf32, #tpu.memory_space<vmem>>, vector<128x128xf32>
    %cst_17 = arith.constant dense<0.000000e+00> : vector<24x128xf32>
    %30 = tpu.matmul %28, %29, %cst_17 {dimension_numbers = #tpu.dot_dimension_numbers<[1], [0], [0], [1], [0, 0, 1, 1], [], []>} : vector<24x128xf32>, vector<128x128xf32>, vector<24x128xf32> -> vector<24x128xf32>
    %c0_18 = arith.constant 0 : index
    %c0_19 = arith.constant 0 : index
    %31 = vector.load %arg6[%c0_18, %c0_19] : memref<1x128xf32, #tpu.memory_space<vmem>>, vector<1x128xf32>
    %32 = vector.broadcast %31 : vector<1x128xf32> to vector<24x128xf32>
    %33 = arith.addf %30, %32 : vector<24x128xf32>
    %cst_20 = arith.constant dense<0xFF800000> : vector<24xf32>
    %34 = vector.multi_reduction <maximumf>, %33, %cst_20 [1] : vector<24x128xf32> to vector<24xf32>
    %35 = vector.shape_cast %34 : vector<24xf32> to vector<24x1xf32>
    %36 = vector.broadcast %35 : vector<24x1xf32> to vector<24x128xf32>
    %37 = arith.subf %33, %36 : vector<24x128xf32>
    %38 = math.exp %37 : vector<24x128xf32>
    %cst_21 = arith.constant dense<0.000000e+00> : vector<24xf32>
    %39 = vector.multi_reduction <add>, %38, %cst_21 [1] : vector<24x128xf32> to vector<24xf32>
    %40 = vector.shape_cast %39 : vector<24xf32> to vector<24x1xf32>
    %41 = math.log %40 : vector<24x1xf32>
    %42 = arith.addf %35, %41 : vector<24x1xf32>
    %43 = vector.broadcast %42 : vector<24x1xf32> to vector<24x128xf32>
    %44 = arith.subf %33, %43 : vector<24x128xf32>
    %c0_22 = arith.constant 0 : index
    %c0_23 = arith.constant 0 : index
    %45 = vector.load %arg7[%c0_22, %c0_23] : memref<24x128xf32, #tpu.memory_space<vmem>>, vector<24x128xf32>
    tpu.vector_store %arg7[%c0_22, %c0_23], %44 {strides = array<i32>} : memref<24x128xf32, #tpu.memory_space<vmem>>, vector<24x128xf32>,
    return
  }
  func.func @transform_0(%arg0: i32) -> (i32, i32) {
    %c0_i32 = arith.constant 0 : i32
    %c0_i32_0 = arith.constant 0 : i32
    return %arg0, %c0_i32 : i32, i32
  }
  func.func @transform_1(%arg0: i32) -> (i32, i32) {
    %c0_i32 = arith.constant 0 : i32
    %c0_i32_0 = arith.constant 0 : i32
    %c0_i32_1 = arith.constant 0 : i32
    return %c0_i32, %c0_i32_0 : i32, i32
  }
  func.func @transform_2(%arg0: i32) -> (i32, i32, i32) {
    %c0_i32 = arith.constant 0 : i32
    %c0_i32_0 = arith.constant 0 : i32
    %c0_i32_1 = arith.constant 0 : i32
    %c0_i32_2 = arith.constant 0 : i32
    return %c0_i32, %c0_i32_0, %c0_i32_1 : i32, i32, i32
  }
  func.func @transform_3(%arg0: i32) -> (i32, i32) {
    %c0_i32 = arith.constant 0 : i32
    %c0_i32_0 = arith.constant 0 : i32
    %c0_i32_1 = arith.constant 0 : i32
    return %c0_i32, %c0_i32_0 : i32, i32
  }
  func.func @transform_4(%arg0: i32) -> (i32, i32) {
    %c0_i32 = arith.constant 0 : i32
    %c0_i32_0 = arith.constant 0 : i32
    %c0_i32_1 = arith.constant 0 : i32
    return %c0_i32, %c0_i32_0 : i32, i32
  }
  func.func @transform_5(%arg0: i32) -> (i32, i32) {
    %c0_i32 = arith.constant 0 : i32
    %c0_i32_0 = arith.constant 0 : i32
    %c0_i32_1 = arith.constant 0 : i32
    return %c0_i32, %c0_i32_0 : i32, i32
  }
  func.func @transform_6(%arg0: i32) -> (i32, i32) {
    %c0_i32 = arith.constant 0 : i32
    %c0_i32_0 = arith.constant 0 : i32
    return %arg0, %c0_i32 : i32, i32
  }
}

</mosaic_0001>

<llo_original>
// kernel: tpu_custom_call.1
$region0: #{tpu_custom_call.1}
  #allocation0 [shape = 'u32[]', space=smem, size = 0x4, offset = 0x4, fixed_abs, tag = 'smem constant byte address 0x4 - core index']
  #allocation1 [shape = 'u32[144,128]{1,0:T(1,128)}', space=vmem, size = 0x12000, scoped, tag = 'internal scratch']
  %s0 = inlined_call_operand.vmem [shape: s32[24,2], index: 0, kind: input, shape index: {}]
  %s1 = inlined_call_operand.vmem [shape: f32[64,5], index: 1, kind: input, shape index: {}]
  %s2 = inlined_call_operand.vmem [shape: f32[2,5,128], index: 2, kind: input, shape index: {}]
  %s3 = inlined_call_operand.vmem [shape: f32[1,128], index: 3, kind: input, shape index: {}]
  %s4 = inlined_call_operand.vmem [shape: f32[128,128], index: 4, kind: input, shape index: {}]
  %s5 = inlined_call_operand.vmem [shape: f32[1,128], index: 5, kind: input, shape index: {}]
  %s6 = inlined_call_operand.hbm [shape: f32[24,128], index: 6, kind: output, shape index: {}]
  %s7 = sld [smem:[#allocation0]]
  $region34: #{tpu_custom_call.1} parent=0
    _
  %s9 = ssub.s32 1, %s7
  %s10 = scalar_select 0, %s9, %s7
  $region1: #{tpu_custom_call.1} parent=0
    #allocation2 [shape = 'u8[12288]{0}', space=vmem, size = 0x3000, scoped, tag = 'output window, operand 0, single buffered']
    #allocation3 [shape = 's32[1]{0}', space=sflag, size = 0x4, scoped, tag = 'scoped memory for tpu_custom_call.1']
    %11 = vsyncpa [#allocation3], 0
    // Predicated region
    $region2: #{tpu_custom_call.1} parent=1 // pred_check
      _
    $region3: #{tpu_custom_call.1} parent=1 // pred_check_branch
      %13 = sbr.rel (0) target = $region5
    $region4: #{tpu_custom_call.1} parent=1 // pred_region
      _
    $region5: #{tpu_custom_call.1} parent=1 // pred_fallthru
      _
    // Predicated region
    $region6: #{tpu_custom_call.1} parent=1 // pred_check
      _
    $region7: #{tpu_custom_call.1} parent=1 // pred_check_branch
      %15 = sbr.rel (0) target = $region9
    $region8: #{tpu_custom_call.1} parent=1 // pred_region
      _
    $region9: #{tpu_custom_call.1} parent=1 // pred_fallthru
      _
    // Predicated region
    $region10: #{tpu_custom_call.1} parent=1 // pred_check
      _
    $region11: #{tpu_custom_call.1} parent=1 // pred_check_branch
      %17 = sbr.rel (0) target = $region13
    $region12: #{tpu_custom_call.1} parent=1 // pred_region
      _
    $region13: #{tpu_custom_call.1} parent=1 // pred_fallthru
      _
    // Predicated region
    $region14: #{tpu_custom_call.1} parent=1 // pred_check
      _
    $region15: #{tpu_custom_call.1} parent=1 // pred_check_branch
      %19 = sbr.rel (0) target = $region17
    $region16: #{tpu_custom_call.1} parent=1 // pred_region
      _
    $region17: #{tpu_custom_call.1} parent=1 // pred_fallthru
      _
    // Predicated region
    $region18: #{tpu_custom_call.1} parent=1 // pred_check
      _
    $region19: #{tpu_custom_call.1} parent=1 // pred_check_branch
      %21 = sbr.rel (0) target = $region21
    $region20: #{tpu_custom_call.1} parent=1 // pred_region
      _
    $region21: #{tpu_custom_call.1} parent=1 // pred_fallthru
      _
    // Predicated region
    $region22: #{tpu_custom_call.1} parent=1 // pred_check
      _
    $region23: #{tpu_custom_call.1} parent=1 // pred_check_branch
      %23 = sbr.rel (0) target = $region25
    $region24: #{tpu_custom_call.1} parent=1 // pred_region
      _
    $region25: #{tpu_custom_call.1} parent=1 // pred_fallthru
      _
    %v24 = vld [vmem:[%s0] sm:$0xff]
    %v25 = vld [vmem:[%s0 + $0x8] sm:$0xff]
    %v26 = vld [vmem:[%s0 + $0x10] sm:$0xff]
    %v27 = vld [vmem:[%s1] sm:$0xff]
    %v28 = vld [vmem:[%s1 + $0x8] sm:$0xff]
    %v29 = vld [vmem:[%s1 + $0x10] sm:$0xff]
    %v30 = vld [vmem:[%s1 + $0x18] sm:$0xff]
    %v31 = vld [vmem:[%s1 + $0x20] sm:$0xff]
    %v32 = vld [vmem:[%s1 + $0x28] sm:$0xff]
    %v33 = vld [vmem:[%s1 + $0x30] sm:$0xff]
    %v34 = vld [vmem:[%s1 + $0x38] sm:$0xff]
    %v35 = vlaneseq
    %v36 = vand.u32 %v35, 127
    %v37 = vld [vmem:[%s2] sm:$0x1f]
    %vm38 = vcmask 39936
    %v40 = vsel %vm38, %v27, 0
    %v43 = vsel %vm38, %v28, 0
    %v46 = vsel %vm38, %v29, 0
    %v49 = vsel %vm38, %v30, 0
    %v52 = vsel %vm38, %v31, 0
    %v55 = vsel %vm38, %v32, 0
    %v58 = vsel %vm38, %v33, 0
    %v61 = vsel %vm38, %v34, 0
    %vm63 = vcmask 1044480
    %v65 = vsel %vm63, %v37, 0
    %67 = vmatprep.subr.mxu0 0.0
    %68 = vmatpush1.msra.mxu0 0.0
    %69 = vmatprep.subr.mxu0 0.0
    %70 = vmatpush1.msra.mxu0 0.0
    %71 = vmatprep.subr.mxu0 0.0
    %72 = vmatpush1.msra.mxu0 0.0
    %73 = vmatprep.subr.mxu0 0.0
    %74 = vmatpush1.msra.mxu0 0.0
    %75 = vmatprep.subr.mxu0 0.0
    %76 = vmatpush1.msra.mxu0 0.0
    %77 = vmatprep.subr.mxu0 0.0
    %78 = vmatpush1.msra.mxu0 0.0
    %79 = vmatprep.subr.mxu0 0.0
    %80 = vmatpush1.msra.mxu0 0.0
    %81 = vmatprep.subr.mxu0 0.0
    %82 = vmatpush1.msra.mxu0 0.0
    %83 = vmatprep.subr.mxu0 0.0
    %84 = vmatpush1.msra.mxu0 0.0
    %85 = vmatprep.subr.mxu0 0.0
    %86 = vmatpush1.msra.mxu0 0.0
    %87 = vmatprep.subr.mxu0 0.0
    %88 = vmatpush1.msra.mxu0 0.0
    %89 = vmatprep.subr.mxu0 0.0
    %90 = vmatpush1.msra.mxu0 0.0
    %91 = vmatprep.subr.mxu0 0.0
    %92 = vmatpush1.msra.mxu0 0.0
    %93 = vmatprep.subr.mxu0 0.0
    %94 = vmatpush1.msra.mxu0 0.0
    %95 = vmatprep.subr.mxu0 0.0
    %96 = vmatpush1.msra.mxu0 0.0
    %97 = vmatprep.subr.mxu0 0.0
    %98 = vmatpush1.msra.mxu0 %v65
    %99 = vmatprep.subr.mxu0 0.0
    %100 = vmatpush2.msra.mxu0 0.0
    %101 = vmatprep.subr.mxu0 0.0
    %102 = vmatpush2.msra.mxu0 0.0
    %103 = vmatprep.subr.mxu0 0.0
    %104 = vmatpush2.msra.mxu0 0.0
    %105 = vmatprep.subr.mxu0 0.0
    %106 = vmatpush2.msra.mxu0 0.0
    %107 = vmatprep.subr.mxu0 0.0
    %108 = vmatpush2.msra.mxu0 0.0
    %109 = vmatprep.subr.mxu0 0.0
    %110 = vmatpush2.msra.mxu0 0.0
    %111 = vmatprep.subr.mxu0 0.0
    %112 = vmatpush2.msra.mxu0 0.0
    %113 = vmatprep.subr.mxu0 0.0
    %114 = vmatpush2.msra.mxu0 0.0
    %115 = vmatprep.subr.mxu0 0.0
    %116 = vmatpush2.msra.mxu0 0.0
    %117 = vmatprep.subr.mxu0 0.0
    %118 = vmatpush2.msra.mxu0 0.0
    %119 = vmatprep.subr.mxu0 0.0
    %120 = vmatpush2.msra.mxu0 0.0
    %121 = vmatprep.subr.mxu0 0.0
    %122 = vmatpush2.msra.mxu0 0.0
    %123 = vmatprep.subr.mxu0 0.0
    %124 = vmatpush2.msra.mxu0 0.0
    %125 = vmatprep.subr.mxu0 0.0
    %126 = vmatpush2.msra.mxu0 0.0
    %127 = vmatprep.subr.mxu0 0.0
    %128 = vmatpush2.msra.mxu0 0.0
    %129 = vmatprep.subr.mxu0 0.0
    %130 = vmatpush2.msra.mxu0 0.0
    %131 = vmatprep.mubr.f32.mxu0 0.0
    %132 = vmatmul.mubr.f32.gmra.mxu0 %v40
    %v133 = vpop.f32.mrf.mxu0
    %v134 = vadd.f32 0.0, %v133
    %v135 = vpop.f32.mrf.mxu0
    %136 = vmatprep.mubr.f32.mxu0 0.0
    %137 = vmatmul.mubr.f32.gmra.mxu0 %v43
    %v138 = vpop.f32.mrf.mxu0
    %v139 = vadd.f32 0.0, %v138
    %v140 = vpop.f32.mrf.mxu0
    %141 = vmatprep.mubr.f32.mxu0 0.0
    %142 = vmatmul.mubr.f32.gmra.mxu0 %v46
    %v143 = vpop.f32.mrf.mxu0
    %v144 = vadd.f32 0.0, %v143
    %v145 = vpop.f32.mrf.mxu0
    %146 = vmatprep.mubr.f32.mxu0 0.0
    %147 = vmatmul.mubr.f32.gmra.mxu0 %v49
    %v148 = vpop.f32.mrf.mxu0
    %v149 = vadd.f32 0.0, %v148
    %v150 = vpop.f32.mrf.mxu0
    %151 = vmatprep.mubr.f32.mxu0 0.0
    %152 = vmatmul.mubr.f32.gmra.mxu0 %v52
    %v153 = vpop.f32.mrf.mxu0
    %v154 = vadd.f32 0.0, %v153
    %v155 = vpop.f32.mrf.mxu0
    %156 = vmatprep.mubr.f32.mxu0 0.0
    %157 = vmatmul.mubr.f32.gmra.mxu0 %v55
    %v158 = vpop.f32.mrf.mxu0
    %v159 = vadd.f32 0.0, %v158
    %v160 = vpop.f32.mrf.mxu0
    %161 = vmatprep.mubr.f32.mxu0 0.0
    %162 = vmatmul.mubr.f32.gmra.mxu0 %v58
    %v163 = vpop.f32.mrf.mxu0
    %v164 = vadd.f32 0.0, %v163
    %v165 = vpop.f32.mrf.mxu0
    %166 = vmatprep.mubr.f32.mxu0 0.0
    %167 = vmatmul.mubr.f32.gmra.mxu0 %v61
    %v168 = vpop.f32.mrf.mxu0
    %v169 = vadd.f32 0.0, %v168
    %v170 = vpop.f32.mrf.mxu0
    %171 = vdwg.mxu0
    %172 = vset.pattern.permute.xlu0 0
    %173 = vperm.xlu0 %172, %v24
    %v174 = vpop.permute.xlu0 %173
    %175 = vset.pattern.permute.xlu0 0
    %176 = vperm.xlu0 %175, %v25
    %v177 = vpop.permute.xlu0 %176
    %178 = vset.pattern.permute.xlu0 0
    %179 = vperm.xlu0 %178, %v26
    %v180 = vpop.permute.xlu0 %179
    %vm181 = vcmp.eq.s32.totalorder %v174, %v36
    %vm182 = vcmp.eq.s32.totalorder %v177, %v36
    %vm183 = vcmp.eq.s32.totalorder %v180, %v36
    %v184 = vsel %vm181, 1, 0
    %v185 = vsel %vm182, 1, 0
    %v186 = vsel %vm183, 1, 0
    %v187 = vcvt.s32.f32 %v184
    %v188 = vcvt.s32.f32 %v185
    %v189 = vcvt.s32.f32 %v186
    %s190 = scalar_lea.vmem %s2, 8
    %v191 = vld [vmem:[%s190] sm:$0x1f]
    %v193 = vsel %vm63, %v191, 0
    %195 = vmatprep.subr.mxu0 0.0
    %196 = vmatpush1.msra.mxu0 0.0
    %197 = vmatprep.subr.mxu0 0.0
    %198 = vmatpush1.msra.mxu0 0.0
    %199 = vmatprep.subr.mxu0 0.0
    %200 = vmatpush1.msra.mxu0 0.0
    %201 = vmatprep.subr.mxu0 0.0
    %202 = vmatpush1.msra.mxu0 0.0
    %203 = vmatprep.subr.mxu0 0.0
    %204 = vmatpush1.msra.mxu0 0.0
    %205 = vmatprep.subr.mxu0 0.0
    %206 = vmatpush1.msra.mxu0 0.0
    %207 = vmatprep.subr.mxu0 0.0
    %208 = vmatpush1.msra.mxu0 0.0
    %209 = vmatprep.subr.mxu0 0.0
    %210 = vmatpush1.msra.mxu0 0.0
    %211 = vmatprep.subr.mxu0 0.0
    %212 = vmatpush1.msra.mxu0 0.0
    %213 = vmatprep.subr.mxu0 0.0
    %214 = vmatpush1.msra.mxu0 0.0
    %215 = vmatprep.subr.mxu0 0.0
    %216 = vmatpush1.msra.mxu0 0.0
    %217 = vmatprep.subr.mxu0 0.0
    %218 = vmatpush1.msra.mxu0 0.0
    %219 = vmatprep.subr.mxu0 0.0
    %220 = vmatpush1.msra.mxu0 0.0
    %221 = vmatprep.subr.mxu0 0.0
    %222 = vmatpush1.msra.mxu0 0.0
    %223 = vmatprep.subr.mxu0 0.0
    %224 = vmatpush1.msra.mxu0 0.0
    %225 = vmatprep.subr.mxu0 0.0
    %226 = vmatpush1.msra.mxu0 %v193
    %227 = vmatprep.subr.mxu0 0.0
    %228 = vmatpush2.msra.mxu0 0.0
    %229 = vmatprep.subr.mxu0 0.0
    %230 = vmatpush2.msra.mxu0 0.0
    %231 = vmatprep.subr.mxu0 0.0
    %232 = vmatpush2.msra.mxu0 0.0
    %233 = vmatprep.subr.mxu0 0.0
    %234 = vmatpush2.msra.mxu0 0.0
    %235 = vmatprep.subr.mxu0 0.0
    %236 = vmatpush2.msra.mxu0 0.0
    %237 = vmatprep.subr.mxu0 0.0
    %238 = vmatpush2.msra.mxu0 0.0
    %239 = vmatprep.subr.mxu0 0.0
    %240 = vmatpush2.msra.mxu0 0.0
    %241 = vmatprep.subr.mxu0 0.0
    %242 = vmatpush2.msra.mxu0 0.0
    %243 = vmatprep.subr.mxu0 0.0
    %244 = vmatpush2.msra.mxu0 0.0
    %245 = vmatprep.subr.mxu0 0.0
    %246 = vmatpush2.msra.mxu0 0.0
    %247 = vmatprep.subr.mxu0 0.0
    %248 = vmatpush2.msra.mxu0 0.0
    %249 = vmatprep.subr.mxu0 0.0
    %250 = vmatpush2.msra.mxu0 0.0
    %251 = vmatprep.subr.mxu0 0.0
    %252 = vmatpush2.msra.mxu0 0.0
    %253 = vmatprep.subr.mxu0 0.0
    %254 = vmatpush2.msra.mxu0 0.0
    %255 = vmatprep.subr.mxu0 0.0
    %256 = vmatpush2.msra.mxu0 0.0
    %257 = vmatprep.subr.mxu0 0.0
    %258 = vmatpush2.msra.mxu0 0.0
    %259 = vmatprep.mubr.f32.mxu0 0.0
    %260 = vmatmul.mubr.f32.gmra.mxu0 %v40
    %v261 = vpop.f32.mrf.mxu0
    %v262 = vadd.f32 0.0, %v261
    %v263 = vpop.f32.mrf.mxu0
    %264 = vmatprep.mubr.f32.mxu0 0.0
    %265 = vmatmul.mubr.f32.gmra.mxu0 %v43
    %v266 = vpop.f32.mrf.mxu0
    %v267 = vadd.f32 0.0, %v266
    %v268 = vpop.f32.mrf.mxu0
    %269 = vmatprep.mubr.f32.mxu0 0.0
    %270 = vmatmul.mubr.f32.gmra.mxu0 %v46
    %v271 = vpop.f32.mrf.mxu0
    %v272 = vadd.f32 0.0, %v271
    %v273 = vpop.f32.mrf.mxu0
    %274 = vmatprep.mubr.f32.mxu0 0.0
    %275 = vmatmul.mubr.f32.gmra.mxu0 %v49
    %v276 = vpop.f32.mrf.mxu0
    %v277 = vadd.f32 0.0, %v276
    %v278 = vpop.f32.mrf.mxu0
    %279 = vmatprep.mubr.f32.mxu0 0.0
    %280 = vmatmul.mubr.f32.gmra.mxu0 %v52
    %v281 = vpop.f32.mrf.mxu0
    %v282 = vadd.f32 0.0, %v281
    %v283 = vpop.f32.mrf.mxu0
    %284 = vmatprep.mubr.f32.mxu0 0.0
    %285 = vmatmul.mubr.f32.gmra.mxu0 %v55
    %v286 = vpop.f32.mrf.mxu0
    %v287 = vadd.f32 0.0, %v286
    %v288 = vpop.f32.mrf.mxu0
    %289 = vmatprep.mubr.f32.mxu0 0.0
    %290 = vmatmul.mubr.f32.gmra.mxu0 %v58
    %v291 = vpop.f32.mrf.mxu0
    %v292 = vadd.f32 0.0, %v291
    %v293 = vpop.f32.mrf.mxu0
    %294 = vmatprep.mubr.f32.mxu0 0.0
    %295 = vmatmul.mubr.f32.gmra.mxu0 %v61
    %v296 = vpop.f32.mrf.mxu0
    %v297 = vadd.f32 0.0, %v296
    %v298 = vpop.f32.mrf.mxu0
    %299 = vdwg.mxu0
    %300 = vset.pattern.permute.xlu0 1
    %301 = vperm.xlu0 %300, %v24
    %v302 = vpop.permute.xlu0 %301
    %303 = vset.pattern.permute.xlu0 1
    %304 = vperm.xlu0 %303, %v25
    %v305 = vpop.permute.xlu0 %304
    %306 = vset.pattern.permute.xlu0 1
    %307 = vperm.xlu0 %306, %v26
    %v308 = vpop.permute.xlu0 %307
    %vm309 = vcmp.eq.s32.totalorder %v302, %v36
    %vm310 = vcmp.eq.s32.totalorder %v305, %v36
    %vm311 = vcmp.eq.s32.totalorder %v308, %v36
    %v312 = vsel %vm309, 1, 0
    %v313 = vsel %vm310, 1, 0
    %v314 = vsel %vm311, 1, 0
    %v315 = vcvt.s32.f32 %v312
    %v316 = vcvt.s32.f32 %v313
    %v317 = vcvt.s32.f32 %v314
    %vm318 = vcmask 523264
    %v320 = vsel %vm318, %v315, 0
    %v323 = vsel %vm318, %v316, 0
    %v326 = vsel %vm318, %v317, 0
    %328 = vmatprep.subr.mxu0 0.0
    %329 = vmatpush1.msra.mxu0 0.0
    %330 = vmatprep.subr.mxu0 0.0
    %331 = vmatpush1.msra.mxu0 0.0
    %332 = vmatprep.subr.mxu0 0.0
    %333 = vmatpush1.msra.mxu0 0.0
    %334 = vmatprep.subr.mxu0 0.0
    %335 = vmatpush1.msra.mxu0 0.0
    %336 = vmatprep.subr.mxu0 0.0
    %337 = vmatpush1.msra.mxu0 0.0
    %338 = vmatprep.subr.mxu0 0.0
    %339 = vmatpush1.msra.mxu0 0.0
    %340 = vmatprep.subr.mxu0 0.0
    %341 = vmatpush1.msra.mxu0 0.0
    %342 = vmatprep.subr.mxu0 0.0
    %343 = vmatpush1.msra.mxu0 0.0
    %344 = vmatprep.subr.mxu0 0.0
    %345 = vmatpush1.msra.mxu0 %v297
    %346 = vmatprep.subr.mxu0 0.0
    %347 = vmatpush1.msra.mxu0 %v292
    %348 = vmatprep.subr.mxu0 0.0
    %349 = vmatpush1.msra.mxu0 %v287
    %350 = vmatprep.subr.mxu0 0.0
    %351 = vmatpush1.msra.mxu0 %v282
    %352 = vmatprep.subr.mxu0 0.0
    %353 = vmatpush1.msra.mxu0 %v277
    %354 = vmatprep.subr.mxu0 0.0
    %355 = vmatpush1.msra.mxu0 %v272
    %356 = vmatprep.subr.mxu0 0.0
    %357 = vmatpush1.msra.mxu0 %v267
    %358 = vmatprep.subr.mxu0 0.0
    %359 = vmatpush1.msra.mxu0 %v262
    %360 = vmatprep.subr.mxu0 0.0
    %361 = vmatpush2.msra.mxu0 0.0
    %362 = vmatprep.subr.mxu0 0.0
    %363 = vmatpush2.msra.mxu0 0.0
    %364 = vmatprep.subr.mxu0 0.0
    %365 = vmatpush2.msra.mxu0 0.0
    %366 = vmatprep.subr.mxu0 0.0
    %367 = vmatpush2.msra.mxu0 0.0
    %368 = vmatprep.subr.mxu0 0.0
    %369 = vmatpush2.msra.mxu0 0.0
    %370 = vmatprep.subr.mxu0 0.0
    %371 = vmatpush2.msra.mxu0 0.0
    %372 = vmatprep.subr.mxu0 0.0
    %373 = vmatpush2.msra.mxu0 0.0
    %374 = vmatprep.subr.mxu0 0.0
    %375 = vmatpush2.msra.mxu0 0.0
    %376 = vmatprep.subr.mxu0 0.0
    %377 = vmatpush2.msra.mxu0 0.0
    %378 = vmatprep.subr.mxu0 0.0
    %379 = vmatpush2.msra.mxu0 0.0
    %380 = vmatprep.subr.mxu0 0.0
    %381 = vmatpush2.msra.mxu0 0.0
    %382 = vmatprep.subr.mxu0 0.0
    %383 = vmatpush2.msra.mxu0 0.0
    %384 = vmatprep.subr.mxu0 0.0
    %385 = vmatpush2.msra.mxu0 0.0
    %386 = vmatprep.subr.mxu0 0.0
    %387 = vmatpush2.msra.mxu0 0.0
    %388 = vmatprep.subr.mxu0 0.0
    %389 = vmatpush2.msra.mxu0 0.0
    %390 = vmatprep.subr.mxu0 0.0
    %391 = vmatpush2.msra.mxu0 0.0
    %392 = vmatprep.mubr.f32.mxu0 0.0
    %393 = vmatmul.mubr.f32.gmra.mxu0 %v320
    %v394 = vpop.f32.mrf.mxu0
    %v395 = vadd.f32 0.0, %v394
    %v396 = vpop.f32.mrf.mxu0
    %397 = vmatprep.mubr.f32.mxu0 0.0
    %398 = vmatmul.mubr.f32.gmra.mxu0 %v323
    %v399 = vpop.f32.mrf.mxu0
    %v400 = vadd.f32 0.0, %v399
    %v401 = vpop.f32.mrf.mxu0
    %402 = vmatprep.mubr.f32.mxu0 0.0
    %403 = vmatmul.mubr.f32.gmra.mxu0 %v326
    %v404 = vpop.f32.mrf.mxu0
    %v405 = vadd.f32 0.0, %v404
    %v406 = vpop.f32.mrf.mxu0
    %407 = vdwg.mxu0
    %v409 = vsel %vm318, %v187, 0
    %v412 = vsel %vm318, %v188, 0
    %v415 = vsel %vm318, %v189, 0
    %417 = vmatprep.subr.mxu0 0.0
    %418 = vmatpush1.msra.mxu0 0.0
    %419 = vmatprep.subr.mxu0 0.0
    %420 = vmatpush1.msra.mxu0 0.0
    %421 = vmatprep.subr.mxu0 0.0
    %422 = vmatpush1.msra.mxu0 0.0
    %423 = vmatprep.subr.mxu0 0.0
    %424 = vmatpush1.msra.mxu0 0.0
    %425 = vmatprep.subr.mxu0 0.0
    %426 = vmatpush1.msra.mxu0 0.0
    %427 = vmatprep.subr.mxu0 0.0
    %428 = vmatpush1.msra.mxu0 0.0
    %429 = vmatprep.subr.mxu0 0.0
    %430 = vmatpush1.msra.mxu0 0.0
    %431 = vmatprep.subr.mxu0 0.0
    %432 = vmatpush1.msra.mxu0 0.0
    %433 = vmatprep.subr.mxu0 0.0
    %434 = vmatpush1.msra.mxu0 %v169
    %435 = vmatprep.subr.mxu0 0.0
    %436 = vmatpush1.msra.mxu0 %v164
    %437 = vmatprep.subr.mxu0 0.0
    %438 = vmatpush1.msra.mxu0 %v159
    %439 = vmatprep.subr.mxu0 0.0
    %440 = vmatpush1.msra.mxu0 %v154
    %441 = vmatprep.subr.mxu0 0.0
    %442 = vmatpush1.msra.mxu0 %v149
    %443 = vmatprep.subr.mxu0 0.0
    %444 = vmatpush1.msra.mxu0 %v144
    %445 = vmatprep.subr.mxu0 0.0
    %446 = vmatpush1.msra.mxu0 %v139
    %447 = vmatprep.subr.mxu0 0.0
    %448 = vmatpush1.msra.mxu0 %v134
    %449 = vmatprep.subr.mxu0 0.0
    %450 = vmatpush2.msra.mxu0 0.0
    %451 = vmatprep.subr.mxu0 0.0
    %452 = vmatpush2.msra.mxu0 0.0
    %453 = vmatprep.subr.mxu0 0.0
    %454 = vmatpush2.msra.mxu0 0.0
    %455 = vmatprep.subr.mxu0 0.0
    %456 = vmatpush2.msra.mxu0 0.0
    %457 = vmatprep.subr.mxu0 0.0
    %458 = vmatpush2.msra.mxu0 0.0
    %459 = vmatprep.subr.mxu0 0.0
    %460 = vmatpush2.msra.mxu0 0.0
    %461 = vmatprep.subr.mxu0 0.0
    %462 = vmatpush2.msra.mxu0 0.0
    %463 = vmatprep.subr.mxu0 0.0
    %464 = vmatpush2.msra.mxu0 0.0
    %465 = vmatprep.subr.mxu0 0.0
    %466 = vmatpush2.msra.mxu0 0.0
    %467 = vmatprep.subr.mxu0 0.0
    %468 = vmatpush2.msra.mxu0 0.0
    %469 = vmatprep.subr.mxu0 0.0
    %470 = vmatpush2.msra.mxu0 0.0
    %471 = vmatprep.subr.mxu0 0.0
    %472 = vmatpush2.msra.mxu0 0.0
    %473 = vmatprep.subr.mxu0 0.0
    %474 = vmatpush2.msra.mxu0 0.0
    %475 = vmatprep.subr.mxu0 0.0
    %476 = vmatpush2.msra.mxu0 0.0
    %477 = vmatprep.subr.mxu0 0.0
    %478 = vmatpush2.msra.mxu0 0.0
    %479 = vmatprep.subr.mxu0 0.0
    %480 = vmatpush2.msra.mxu0 0.0
    %481 = vmatprep.mubr.f32.mxu0 0.0
    %482 = vmatmul.mubr.f32.gmra.mxu0 %v409
    %v483 = vpop.f32.mrf.mxu0
    %v484 = vadd.f32 %v395, %v483
    %v485 = vpop.f32.mrf.mxu0
    %486 = vmatprep.mubr.f32.mxu0 0.0
    %487 = vmatmul.mubr.f32.gmra.mxu0 %v412
    %v488 = vpop.f32.mrf.mxu0
    %v489 = vadd.f32 %v400, %v488
    %v490 = vpop.f32.mrf.mxu0
    %491 = vmatprep.mubr.f32.mxu0 0.0
    %492 = vmatmul.mubr.f32.gmra.mxu0 %v415
    %v493 = vpop.f32.mrf.mxu0
    %v494 = vadd.f32 %v405, %v493
    %v495 = vpop.f32.mrf.mxu0
    %496 = vdwg.mxu0
    %v497 = vld [vmem:[%s3] sm:$0x1]
    %v499 = vlaneseq
    %v500 = vshrl.u32 %v499, 7
    %v501 = vsub.s32 0, %v500
    %v502 = vrot.slane %v497, %v501
    %v504 = vadd.f32 %v484, %v502
    %v505 = vadd.f32 %v489, %v502
    %v506 = vadd.f32 %v494, %v502
    %v507 = vmax.f32 %v504, 0.0
    %v508 = vmax.f32 %v505, 0.0
    %v509 = vmax.f32 %v506, 0.0
    %v510 = vld [vmem:[%s4] sm:$0xff]
    %v511 = vld [vmem:[%s4 + $0x8] sm:$0xff]
    %v512 = vld [vmem:[%s4 + $0x10] sm:$0xff]
    %v513 = vld [vmem:[%s4 + $0x18] sm:$0xff]
    %v514 = vld [vmem:[%s4 + $0x20] sm:$0xff]
    %v515 = vld [vmem:[%s4 + $0x28] sm:$0xff]
    %v516 = vld [vmem:[%s4 + $0x30] sm:$0xff]
    %v517 = vld [vmem:[%s4 + $0x38] sm:$0xff]
    %v518 = vld [vmem:[%s4 + $0x40] sm:$0xff]
    %v519 = vld [vmem:[%s4 + $0x48] sm:$0xff]
    %v520 = vld [vmem:[%s4 + $0x50] sm:$0xff]
    %v521 = vld [vmem:[%s4 + $0x58] sm:$0xff]
    %v522 = vld [vmem:[%s4 + $0x60] sm:$0xff]
    %v523 = vld [vmem:[%s4 + $0x68] sm:$0xff]
    %v524 = vld [vmem:[%s4 + $0x70] sm:$0xff]
    %v525 = vld [vmem:[%s4 + $0x78] sm:$0xff]
    %v526 = vld [vmem:[%s5] sm:$0x1]
    %v528 = vlaneseq
    %v529 = vshrl.u32 %v528, 7
    %v530 = vsub.s32 0, %v529
    %v531 = vrot.slane %v526, %v530
    %533 = vmatprep.subr.mxu0 0.0
    %534 = vmatpush1.msra.mxu0 %v525
    %535 = vmatprep.subr.mxu0 0.0
    %536 = vmatpush1.msra.mxu0 %v524
    %537 = vmatprep.subr.mxu0 0.0
    %538 = vmatpush1.msra.mxu0 %v523
    %539 = vmatprep.subr.mxu0 0.0
    %540 = vmatpush1.msra.mxu0 %v522
    %541 = vmatprep.subr.mxu0 0.0
    %542 = vmatpush1.msra.mxu0 %v521
    %543 = vmatprep.subr.mxu0 0.0
    %544 = vmatpush1.msra.mxu0 %v520
    %545 = vmatprep.subr.mxu0 0.0
    %546 = vmatpush1.msra.mxu0 %v519
    %547 = vmatprep.subr.mxu0 0.0
    %548 = vmatpush1.msra.mxu0 %v518
    %549 = vmatprep.subr.mxu0 0.0
    %550 = vmatpush1.msra.mxu0 %v517
    %551 = vmatprep.subr.mxu0 0.0
    %552 = vmatpush1.msra.mxu0 %v516
    %553 = vmatprep.subr.mxu0 0.0
    %554 = vmatpush1.msra.mxu0 %v515
    %555 = vmatprep.subr.mxu0 0.0
    %556 = vmatpush1.msra.mxu0 %v514
    %557 = vmatprep.subr.mxu0 0.0
    %558 = vmatpush1.msra.mxu0 %v513
    %559 = vmatprep.subr.mxu0 0.0
    %560 = vmatpush1.msra.mxu0 %v512
    %561 = vmatprep.subr.mxu0 0.0
    %562 = vmatpush1.msra.mxu0 %v511
    %563 = vmatprep.subr.mxu0 0.0
    %564 = vmatpush1.msra.mxu0 %v510
    %565 = vmatprep.subr.mxu0 0.0
    %566 = vmatpush2.msra.mxu0 0.0
    %567 = vmatprep.subr.mxu0 0.0
    %568 = vmatpush2.msra.mxu0 0.0
    %569 = vmatprep.subr.mxu0 0.0
    %570 = vmatpush2.msra.mxu0 0.0
    %571 = vmatprep.subr.mxu0 0.0
    %572 = vmatpush2.msra.mxu0 0.0
    %573 = vmatprep.subr.mxu0 0.0
    %574 = vmatpush2.msra.mxu0 0.0
    %575 = vmatprep.subr.mxu0 0.0
    %576 = vmatpush2.msra.mxu0 0.0
    %577 = vmatprep.subr.mxu0 0.0
    %578 = vmatpush2.msra.mxu0 0.0
    %579 = vmatprep.subr.mxu0 0.0
    %580 = vmatpush2.msra.mxu0 0.0
    %581 = vmatprep.subr.mxu0 0.0
    %582 = vmatpush2.msra.mxu0 0.0
    %583 = vmatprep.subr.mxu0 0.0
    %584 = vmatpush2.msra.mxu0 0.0
    %585 = vmatprep.subr.mxu0 0.0
    %586 = vmatpush2.msra.mxu0 0.0
    %587 = vmatprep.subr.mxu0 0.0
    %588 = vmatpush2.msra.mxu0 0.0
    %589 = vmatprep.subr.mxu0 0.0
    %590 = vmatpush2.msra.mxu0 0.0
    %591 = vmatprep.subr.mxu0 0.0
    %592 = vmatpush2.msra.mxu0 0.0
    %593 = vmatprep.subr.mxu0 0.0
    %594 = vmatpush2.msra.mxu0 0.0
    %595 = vmatprep.subr.mxu0 0.0
    %596 = vmatpush2.msra.mxu0 0.0
    %597 = vmatprep.mubr.f32.mxu0 0.0
    %598 = vmatmul.mubr.f32.gmra.mxu0 %v507
    %v599 = vpop.f32.mrf.mxu0
    %v600 = vadd.f32 %v531, %v599
    %v601 = vpop.f32.mrf.mxu0
    %602 = vmatprep.mubr.f32.mxu0 0.0
    %603 = vmatmul.mubr.f32.gmra.mxu0 %v508
    %v604 = vpop.f32.mrf.mxu0
    %v605 = vadd.f32 %v531, %v604
    %v606 = vpop.f32.mrf.mxu0
    %607 = vmatprep.mubr.f32.mxu0 0.0
    %608 = vmatmul.mubr.f32.gmra.mxu0 %v509
    %v609 = vpop.f32.mrf.mxu0
    %v610 = vadd.f32 %v531, %v609
    %v611 = vpop.f32.mrf.mxu0
    %612 = vdwg.mxu0
    %613 = vmax.xlane.f32.xlu0 %v600
    %v614 = vpop.xlane.xlu0 %613
    %615 = vmax.xlane.f32.xlu0 %v605
    %v616 = vpop.xlane.xlu0 %615
    %617 = vmax.xlane.f32.xlu0 %v610
    %v618 = vpop.xlane.xlu0 %617
    %v619 = vsub.f32 %v600, %v614
    %v620 = vsub.f32 %v605, %v616
    %v621 = vsub.f32 %v610, %v618
    %v622 = vmul.f32 %v619, 1.442695
    %v623 = vpow.pop %v622
    %v624 = vmul.f32 %v620, 1.442695
    %v625 = vpow.pop %v624
    %v626 = vmul.f32 %v621, 1.442695
    %v627 = vpow.pop %v626
    %628 = vadd.xlane.f32.xlu0 %v623
    %v629 = vpop.xlane.xlu0 %628
    %630 = vadd.xlane.f32.xlu0 %v625
    %v631 = vpop.xlane.xlu0 %630
    %632 = vadd.xlane.f32.xlu0 %v627
    %v633 = vpop.xlane.xlu0 %632
    %v634 = vlog2.pop %v629
    %v635 = vmul.f32 %v634, 0.6931472
    %v636 = vlog2.pop %v631
    %v637 = vmul.f32 %v636, 0.6931472
    %v638 = vlog2.pop %v633
    %v639 = vmul.f32 %v638, 0.6931472
    %v640 = vadd.f32 %v614, %v635
    %v641 = vadd.f32 %v616, %v637
    %v642 = vadd.f32 %v618, %v639
    %v643 = vsub.f32 %v600, %v640
    %v644 = vsub.f32 %v605, %v641
    %v645 = vsub.f32 %v610, %v642
    %646 = vst [vmem:[#allocation2] sm:$0xff] %v643
    %647 = vst [vmem:[#allocation2 + $0x8] sm:$0xff] %v644
    %648 = vst [vmem:[#allocation2 + $0x10] sm:$0xff] %v645
    // Predicated region
    $region26: #{tpu_custom_call.1} parent=1 // pred_check
      _
    $region27: #{tpu_custom_call.1} parent=1 // pred_check_branch
      %650 = sbr.rel (0) target = $region29
    $region28: #{tpu_custom_call.1} parent=1 // pred_region
      %s652 = ssub.s32 384, 384
      %653 = vsyncadd [#allocation3], %s652
      %s654 = sshll.u32 [#allocation2], 4
      %s655 = int_to_ptr.vmem [resolvable:$true] %s654
      %660 = dma.vmem_to_hbm [thread:$0]  %s655, 384, %s6, [#allocation3], 128, 128, 8
    $region29: #{tpu_custom_call.1} parent=1 // pred_fallthru
      _
    // Predicated region
    $region30: #{tpu_custom_call.1} parent=1 // pred_check
      _
    $region31: #{tpu_custom_call.1} parent=1 // pred_check_branch
      %662 = sbr.rel (0) target = $region33
    $region32: #{tpu_custom_call.1} parent=1 // pred_region
      %663 = dma.done [#allocation3], 384
    $region33: #{tpu_custom_call.1} parent=1 // pred_fallthru
      _
    %664 = vsyncpa [#allocation3], 1

</llo_original>
